<compile_context>
chip_gen: v7x
topology: tpu7x:2x2x1
jax: 0.10.0
libtpu: 0.0.40
codegen_flags: <defaults>
</compile_context>

<pallas_src>
import numpy as np
import jax
import jax.numpy as jnp
from jax.experimental import pallas as pl
from jax.experimental.pallas import tpu as pltpu

CLIP_MEAN = np.array([0.48145466, 0.4578275, 0.40821073], dtype=np.float32)
CLIP_STD = np.array([0.26862954, 0.26130258, 0.27577711], dtype=np.float32)


# ---------------------------------------------------------------------------
# Parameter / weight-matrix setup (plain numpy glue)
# ---------------------------------------------------------------------------
def _bicubic_weight_matrix(in_size: int, out_size: int, a: float = -0.75) -> np.ndarray:
    """Dense (out_size, in_size) bicubic interpolation matrix (no antialias)."""
    scale = in_size / out_size
    out_idx = np.arange(out_size)
    src = (out_idx + 0.5) * scale - 0.5
    i0 = np.floor(src).astype(np.int64)
    t = src - i0

    def cubic(x):
        x = np.abs(x)
        return np.where(
            x <= 1.0,
            (a + 2.0) * x**3 - (a + 3.0) * x**2 + 1.0,
            np.where(x < 2.0, a * x**3 - 5.0 * a * x**2 + 8.0 * a * x - 4.0 * a, 0.0),
        )

    W = np.zeros((out_size, in_size), dtype=np.float64)
    for k in range(-1, 3):
        idx = np.clip(i0 + k, 0, in_size - 1)
        w = cubic(t - k)
        np.add.at(W, (out_idx, idx), w)
    return W.astype(np.float32)


def _resize_output_size(h: int, w: int, size: int):
    """torchvision Resize([size]): resize the shorter edge to `size`."""
    short, long = (w, h) if w <= h else (h, w)
    new_short, new_long = size, int(size * long / short)
    new_w, new_h = (new_short, new_long) if w <= h else (new_long, new_short)
    return new_h, new_w


def _crop_resize_weights(H: int, W: int, image_size: int):
    """Bicubic resize matrices with the center crop folded in. f32 numpy arrays."""
    new_h, new_w = _resize_output_size(H, W, image_size)
    assert new_h >= image_size and new_w >= image_size  # TODO(synk): CenterCrop padding path
    wh_full = _bicubic_weight_matrix(H, new_h)           # (new_h, H)
    ww_full = _bicubic_weight_matrix(W, new_w)           # (new_w, W)
    top = int(round((new_h - image_size) / 2.0))
    left = int(round((new_w - image_size) / 2.0))
    wh = wh_full[top:top + image_size]                   # (So, H)
    wwt = ww_full[left:left + image_size].T              # (W, So)
    return np.ascontiguousarray(wh), np.ascontiguousarray(wwt)


# ---------------------------------------------------------------------------
# Generation-aware VMEM budget / core-count detection
# ---------------------------------------------------------------------------
def _vmem_budget_and_limit():
    phys = None
    try:
        phys = getattr(pltpu.get_tpu_info(), "vmem_capacity_bytes", None)
    except Exception:
        phys = None
    if phys is None:
        kind = ""
        try:
            kind = jax.devices()[0].device_kind.lower()
        except Exception:
            pass
        phys = (128 << 20) if ("v5" in kind or "v6" in kind) else (64 << 20)
    if phys >= (128 << 20):          # v5e / v6e: 128 MiB physical VMEM
        return 64 << 20, 96 << 20
    return 36 << 20, 48 << 20        # v7x-class (64 MiB physical) or unknown


def _num_tensorcores():
    try:
        kind = jax.devices()[0].device_kind.lower()
        if "v7" in kind:
            return 2
    except Exception:
        pass
    return 1


# ---------------------------------------------------------------------------
# Tile-size selection
# ---------------------------------------------------------------------------
def _step_vmem_bytes(P, Ht, W, So, width_first):
    b = 2 * P * Ht * W * 4                      # f32 input block, double-buffered
    b += 2 * P * So * So * 4                    # f32 output block, double-buffered
    b += 2 * Ht * So * 4 + 2 * W * So * 4       # 2D weight blocks (f32)
    b += P * Ht * W * 2                         # in-kernel bf16 cast of the input
    b += P * So * Ht * 2 + 8 * So * Ht          # broadcast Wh + transpose/cast temps
    b += (P * Ht * So * 6) if width_first else (P * So * W * 6)   # t in f32 + bf16
    b += P * So * So * 4                        # matmul result before epilogue
    return b


def _choose_tiling(B, C, H, W, So, budget, n_tc):
    """Return (P, Ht, n_h, width_first)."""
    width_first = W > H                          # contract the longer input edge first
    ks = [k for k in range(B, 0, -1) if B % k == 0]
    if n_tc >= 2 and B >= 2:
        # only reserve >= 2 plane-groups when the chip actually has 2 TensorCores
        ks = [k for k in ks if (B // k) >= 2] or [1]
    for k in ks:                                 # biggest P that fits the budget
        P = k * C
        if _step_vmem_bytes(P, H, W, So, width_first) <= budget:
            return P, H, 1, width_first
    # Even one C-plane group does not fit untiled: tile H and accumulate partial
    # results (width-first order so each H-tile is a rank-Ht update of the output).
    P = C
    hts = sorted((d for d in range(8, H, 8) if H % d == 0), reverse=True)
    for Ht in hts:
        if _step_vmem_bytes(P, Ht, W, So, True) <= budget:
            return P, Ht, H // Ht, True
    if hts:
        Ht = hts[-1]
        return P, Ht, H // Ht, True
    # TODO(synk): H has no multiple-of-8 divisor; fall back to untiled (may exceed
    # the VMEM budget for extreme image sizes).
    return P, H, 1, width_first


# ---------------------------------------------------------------------------
# Kernel: (Wh @ X @ Ww^T) * invstd + offset, fused, bf16 matmuls / f32 accum
# ---------------------------------------------------------------------------
def _make_kernel(width_first, wh_transposed, P, Ht, W, So, n_h):
    def kernel(x_ref, wh_ref, wwt_ref, inv_ref, off_ref, o_ref):
        x = x_ref[...].astype(jnp.bfloat16)                 # (P, Ht, W); cast in-kernel
        wwt = wwt_ref[...].astype(jnp.bfloat16)             # (W, So), shared RHS
        if wh_transposed:                                    # H-tiled path: block is (Ht, So)
            wh = wh_ref[...].T.astype(jnp.bfloat16)          # -> (So, Ht)
        else:
            wh = wh_ref[...].astype(jnp.bfloat16)            # (So, Ht)
        # in-VMEM broadcast only (weights stay 2D in HBM)
        wh_b = jnp.broadcast_to(wh[None], (P, So, Ht))

        if width_first:
            # collapsed 2D MXU matmul with the shared weight as RHS
            t = jnp.dot(x.reshape(P * Ht, W), wwt,
                        preferred_element_type=jnp.float32)           # (P*Ht, So)
            t = t.reshape(P, Ht, So).astype(jnp.bfloat16)
            y = jnp.einsum("poh,phq->poq", wh_b, t,
                           preferred_element_type=jnp.float32)        # (P, So, So)
        else:
            t = jnp.einsum("poh,phw->pow", wh_b, x,
                           preferred_element_type=jnp.float32)        # (P, So, W)
            t = t.astype(jnp.bfloat16)
            y = jnp.dot(t.reshape(P * So, W), wwt,
                        preferred_element_type=jnp.float32).reshape(P, So, So)

        inv = inv_ref[...]                                   # (P, 1, 1)
        off = off_ref[...]                                   # (P, 1, 1)

        if n_h == 1:
            # single fused full-block epilogue store
            o_ref[...] = y * inv + off
        else:
            k = pl.program_id(1)

            @pl.when(k == 0)
            def _():
                o_ref[...] = jnp.zeros_like(o_ref)

            o_ref[...] += y                                   # accumulate over H tiles

            @pl.when(k == n_h - 1)
            def _():
                o_ref[...] = o_ref[...] * inv + off

    return kernel


def clip_transform(x: jax.Array, image_size: int) -> jax.Array:
    """x: (B, C, H, W) float32 in [0, 1]  ->  (B, C, image_size, image_size) f32."""
    B, C, H, W = x.shape
    assert C == 3, "Normalize mean/std are 3-channel"
    So = image_size

    wh, wwt = _crop_resize_weights(H, W, So)     # (So, H), (W, So) f32

    budget, vmem_limit = _vmem_budget_and_limit()
    n_tc = _num_tensorcores()
    P, Ht, n_h, width_first = _choose_tiling(B, C, H, W, So, budget, n_tc)

    total = B * C
    n_groups = total // P
    x_planes = x.reshape(total, H, W)            # stays f32; bf16 cast happens in-kernel

    # Per-plane normalization constants (channel = plane % C within each block).
    reps = P // C
    inv_p = jnp.asarray(np.tile(1.0 / CLIP_STD, reps).reshape(P, 1, 1).astype(np.float32))
    off_p = jnp.asarray(np.tile(-CLIP_MEAN / CLIP_STD, reps).reshape(P, 1, 1).astype(np.float32))

    wh_transposed = n_h > 1
    if wh_transposed:
        wh_arr = jnp.asarray(np.ascontiguousarray(wh.T))                  # (H, So)
        wh_spec = pl.BlockSpec((Ht, So), lambda i, k: (k, 0))
    else:
        wh_arr = jnp.asarray(wh)                                          # (So, H)
        wh_spec = pl.BlockSpec((So, H), lambda i, k: (0, 0))

    wwt_arr = jnp.asarray(wwt)                                            # (W, So)

    kernel = _make_kernel(width_first, wh_transposed, P, Ht, W, So, n_h)

    # NOTE: weight blocks have constant index maps so they are DMA'd once; they are
    # small 2D arrays so the default double-buffering overhead is negligible
    # (pipeline_mode=pl.Buffered(1) would shave a few hundred KB at most).
    out = pl.pallas_call(
        kernel,
        out_shape=jax.ShapeDtypeStruct((total, So, So), jnp.float32),
        grid_spec=pltpu.PrefetchScalarGridSpec(
            num_scalar_prefetch=0,
            grid=(n_groups, n_h),
            in_specs=[
                pl.BlockSpec((P, Ht, W), lambda i, k: (i, k, 0)),   # image planes
                wh_spec,                                            # Wh (2D, constant/tiled)
                pl.BlockSpec((W, So), lambda i, k: (0, 0)),         # Ww^T (2D, constant)
                pl.BlockSpec((P, 1, 1), lambda i, k: (0, 0, 0)),    # 1/std per plane
                pl.BlockSpec((P, 1, 1), lambda i, k: (0, 0, 0)),    # -mean/std per plane
            ],
            out_specs=pl.BlockSpec((P, So, So), lambda i, k: (i, 0, 0)),
        ),
        compiler_params=pltpu.CompilerParams(
            dimension_semantics=("parallel", "arbitrary"),
            vmem_limit_bytes=vmem_limit,
        ),
    )(x_planes, wh_arr, wwt_arr, inv_p, off_p)

    return out.reshape(B, C, So, So)


if __name__ == "__main__":
    key = jax.random.PRNGKey(0)
    B, C, H, W = 2, 3, 24, 20          # non-square to exercise resize + center crop
    IMAGE_SIZE = 16
    x = jax.random.uniform(key, (B, C, H, W), dtype=jnp.float32)   # "image" in [0, 1]

    y = clip_transform(x, IMAGE_SIZE)
    y = jax.block_until_ready(y)

    assert y.shape == (B, C, IMAGE_SIZE, IMAGE_SIZE), y.shape
    assert y.dtype == jnp.float32
    assert bool(jnp.all(jnp.isfinite(y)))

    # f32 reference with the same (non-antialiased) bicubic weights; loose tolerance
    # accounts for the bf16 matmul operands (f32 accumulation).
    wh, wwt = _crop_resize_weights(H, W, IMAGE_SIZE)
    ref = jnp.einsum("oh,bchw->bcow", jnp.asarray(wh), x)
    ref = jnp.einsum("bchw,wq->bchq", ref, jnp.asarray(wwt))
    ref = (ref - jnp.asarray(CLIP_MEAN).reshape(1, C, 1, 1)) / jnp.asarray(CLIP_STD).reshape(1, C, 1, 1)
    max_err = float(jnp.max(jnp.abs(y - ref)))
    assert max_err < 0.2, max_err

    print("KERNEL_OK")
</pallas_src>

<mosaic_0001>
module attributes {stable_mosaic.version = 11 : i64} {
  func.func @kernel(%arg0: i32, %arg1: i32, %arg2: memref<6x24x20xf32, #tpu.memory_space<vmem>>, %arg3: memref<16x24xf32, #tpu.memory_space<vmem>>, %arg4: memref<20x16xf32, #tpu.memory_space<vmem>>, %arg5: memref<6x1x1xf32, #tpu.memory_space<vmem>>, %arg6: memref<6x1x1xf32, #tpu.memory_space<vmem>>, %arg7: memref<6x16x16xf32, #tpu.memory_space<vmem>>) attributes {dimension_semantics = [#tpu.dimension_semantics<parallel>, #tpu.dimension_semantics<arbitrary>], iteration_bounds = array<i64: 1, 1>, scalar_prefetch = 0 : i64, scratch_operands = 0 : i64, tpu.core_type = #tpu.core_type<tc>, window_params = [{transform_indices = @transform_0, window_bounds = array<i64: 6, 24, 20>}, {pipeline_mode = #tpu.pipeline_mode<synchronous>, transform_indices = @transform_1, window_bounds = array<i64: 16, 24>}, {pipeline_mode = #tpu.pipeline_mode<synchronous>, transform_indices = @transform_2, window_bounds = array<i64: 20, 16>}, {pipeline_mode = #tpu.pipeline_mode<synchronous>, transform_indices = @transform_3, window_bounds = array<i64: 6, 1, 1>}, {pipeline_mode = #tpu.pipeline_mode<synchronous>, transform_indices = @transform_4, window_bounds = array<i64: 6, 1, 1>}, {transform_indices = @transform_5, window_bounds = array<i64: 6, 16, 16>}]} {
    %c0 = arith.constant 0 : index
    %c0_0 = arith.constant 0 : index
    %c0_1 = arith.constant 0 : index
    %0 = vector.load %arg2[%c0, %c0_0, %c0_1] : memref<6x24x20xf32, #tpu.memory_space<vmem>>, vector<6x24x20xf32>
    %1 = arith.truncf %0 : vector<6x24x20xf32> to vector<6x24x20xbf16>
    %c0_2 = arith.constant 0 : index
    %c0_3 = arith.constant 0 : index
    %2 = vector.load %arg4[%c0_2, %c0_3] : memref<20x16xf32, #tpu.memory_space<vmem>>, vector<20x16xf32>
    %3 = arith.truncf %2 : vector<20x16xf32> to vector<20x16xbf16>
    %c0_4 = arith.constant 0 : index
    %c0_5 = arith.constant 0 : index
    %4 = vector.load %arg3[%c0_4, %c0_5] : memref<16x24xf32, #tpu.memory_space<vmem>>, vector<16x24xf32>
    %5 = arith.truncf %4 : vector<16x24xf32> to vector<16x24xbf16>
    %6 = vector.shape_cast %5 : vector<16x24xbf16> to vector<1x16x24xbf16>
    %7 = vector.shape_cast %6 : vector<1x16x24xbf16> to vector<1x16x24xbf16>
    %8 = vector.broadcast %7 : vector<1x16x24xbf16> to vector<6x16x24xbf16>
    "tpu.trace_start"() <{level = 10 : i32, message = "poh,phw->pow"}> : () -> ()
    %cst = arith.constant dense<0.000000e+00> : vector<6x16x20xf32>
    %9 = tpu.matmul %8, %1, %cst {dimension_numbers = #tpu.dot_dimension_numbers<[2], [1], [1], [2], [0, 0, 0, 1, 1, 2], [0], [0]>} : vector<6x16x24xbf16>, vector<6x24x20xbf16>, vector<6x16x20xf32> -> vector<6x16x20xf32>
    "tpu.trace_stop"() : () -> ()
    %10 = arith.truncf %9 : vector<6x16x20xf32> to vector<6x16x20xbf16>
    %11 = vector.shape_cast %10 : vector<6x16x20xbf16> to vector<96x20xbf16>
    %cst_6 = arith.constant dense<0.000000e+00> : vector<96x16xf32>
    %12 = tpu.matmul %11, %3, %cst_6 {dimension_numbers = #tpu.dot_dimension_numbers<[1], [0], [0], [1], [0, 0, 1, 1], [], []>} : vector<96x20xbf16>, vector<20x16xbf16>, vector<96x16xf32> -> vector<96x16xf32>
    %13 = vector.shape_cast %12 : vector<96x16xf32> to vector<6x16x16xf32>
    %c0_7 = arith.constant 0 : index
    %c0_8 = arith.constant 0 : index
    %c0_9 = arith.constant 0 : index
    %14 = vector.load %arg5[%c0_7, %c0_8, %c0_9] : memref<6x1x1xf32, #tpu.memory_space<vmem>>, vector<6x1x1xf32>
    %c0_10 = arith.constant 0 : index
    %c0_11 = arith.constant 0 : index
    %c0_12 = arith.constant 0 : index
    %15 = vector.load %arg6[%c0_10, %c0_11, %c0_12] : memref<6x1x1xf32, #tpu.memory_space<vmem>>, vector<6x1x1xf32>
    %16 = vector.broadcast %14 : vector<6x1x1xf32> to vector<6x16x16xf32>
    %17 = arith.mulf %13, %16 : vector<6x16x16xf32>
    %18 = vector.broadcast %15 : vector<6x1x1xf32> to vector<6x16x16xf32>
    %19 = arith.addf %17, %18 : vector<6x16x16xf32>
    %c0_13 = arith.constant 0 : index
    %c0_14 = arith.constant 0 : index
    %c0_15 = arith.constant 0 : index
    %20 = vector.load %arg7[%c0_13, %c0_14, %c0_15] : memref<6x16x16xf32, #tpu.memory_space<vmem>>, vector<6x16x16xf32>
    tpu.vector_store %arg7[%c0_13, %c0_14, %c0_15], %19 {strides = array<i32>} : memref<6x16x16xf32, #tpu.memory_space<vmem>>, vector<6x16x16xf32>,
    return
  }
  func.func @transform_0(%arg0: i32, %arg1: i32) -> (i32, i32, i32) {
    %c0_i32 = arith.constant 0 : i32
    %c0_i32_0 = arith.constant 0 : i32
    return %arg0, %arg1, %c0_i32 : i32, i32, i32
  }
  func.func @transform_1(%arg0: i32, %arg1: i32) -> (i32, i32) {
    %c0_i32 = arith.constant 0 : i32
    %c0_i32_0 = arith.constant 0 : i32
    %c0_i32_1 = arith.constant 0 : i32
    return %c0_i32, %c0_i32_0 : i32, i32
  }
  func.func @transform_2(%arg0: i32, %arg1: i32) -> (i32, i32) {
    %c0_i32 = arith.constant 0 : i32
    %c0_i32_0 = arith.constant 0 : i32
    %c0_i32_1 = arith.constant 0 : i32
    return %c0_i32, %c0_i32_0 : i32, i32
  }
  func.func @transform_3(%arg0: i32, %arg1: i32) -> (i32, i32, i32) {
    %c0_i32 = arith.constant 0 : i32
    %c0_i32_0 = arith.constant 0 : i32
    %c0_i32_1 = arith.constant 0 : i32
    %c0_i32_2 = arith.constant 0 : i32
    return %c0_i32, %c0_i32_0, %c0_i32_1 : i32, i32, i32
  }
  func.func @transform_4(%arg0: i32, %arg1: i32) -> (i32, i32, i32) {
    %c0_i32 = arith.constant 0 : i32
    %c0_i32_0 = arith.constant 0 : i32
    %c0_i32_1 = arith.constant 0 : i32
    %c0_i32_2 = arith.constant 0 : i32
    return %c0_i32, %c0_i32_0, %c0_i32_1 : i32, i32, i32
  }
  func.func @transform_5(%arg0: i32, %arg1: i32) -> (i32, i32, i32) {
    %c0_i32 = arith.constant 0 : i32
    %c0_i32_0 = arith.constant 0 : i32
    %c0_i32_1 = arith.constant 0 : i32
    return %arg0, %c0_i32, %c0_i32_0 : i32, i32, i32
  }
}

</mosaic_0001>

<llo_original>
// kernel: tpu_custom_call.1
$region0: #{tpu_custom_call.1}
  #allocation0 [shape = 'u32[]', space=smem, size = 0x4, offset = 0x4, fixed_abs, tag = 'smem constant byte address 0x4 - core index']
  #allocation1 [shape = 'u32[144,128]{1,0:T(1,128)}', space=vmem, size = 0x12000, scoped, tag = 'internal scratch']
  %s0 = inlined_call_operand.hbm [shape: f32[6,24,20], index: 0, kind: input, shape index: {}]
  %s1 = inlined_call_operand.vmem [shape: f32[16,24], index: 1, kind: input, shape index: {}]
  %s2 = inlined_call_operand.vmem [shape: f32[20,16], index: 2, kind: input, shape index: {}]
  %s3 = inlined_call_operand.vmem [shape: f32[6,1,1], index: 3, kind: input, shape index: {}]
  %s4 = inlined_call_operand.vmem [shape: f32[6,1,1], index: 4, kind: input, shape index: {}]
  %s5 = inlined_call_operand.hbm [shape: f32[6,16,16], index: 5, kind: output, shape index: {}]
  %s6 = sld [smem:[#allocation0]]
  $region34: #{tpu_custom_call.1} parent=0
    _
  %s8 = ssub.s32 1, %s6
  %s9 = scalar_select 0, %s8, %s6
  $region1: #{tpu_custom_call.1} parent=0
    #allocation2 [shape = 'u8[73728]{0}', space=vmem, size = 0x12000, scoped, tag = 'input window, operand 0, single buffered']
    #allocation3 [shape = 's32[1]{0}', space=sflag, size = 0x4, scoped, tag = 'scoped memory for tpu_custom_call.1']
    #allocation4 [shape = 's32[1]{0}', space=sflag, size = 0x4, scoped, tag = 'scoped memory for tpu_custom_call.1']
    #allocation5 [shape = 'u8[49152]{0}', space=vmem, size = 0xc000, scoped, tag = 'output window, operand 0, single buffered']
    %10 = vsyncpa [#allocation3], 0
    %11 = vsyncpa [#allocation4], 0
    // Predicated region
    $region2: #{tpu_custom_call.1} parent=1 // pred_check
      _
    $region3: #{tpu_custom_call.1} parent=1 // pred_check_branch
      %13 = sbr.rel (0) target = $region5
    $region4: #{tpu_custom_call.1} parent=1 // pred_region
      %s15 = ssub.s32 2304, 2304
      %16 = vsyncadd [#allocation3], %s15
      %s17 = sshll.u32 [#allocation2], 4
      %s18 = int_to_ptr.vmem [resolvable:$true] %s17
      %23 = dma.hbm_to_vmem [thread:$0]  %s0, 2304, %s18, [#allocation3], 128, 128, 8
    $region5: #{tpu_custom_call.1} parent=1 // pred_fallthru
      _
    // Predicated region
    $region6: #{tpu_custom_call.1} parent=1 // pred_check
      _
    $region7: #{tpu_custom_call.1} parent=1 // pred_check_branch
      %25 = sbr.rel (0) target = $region9
    $region8: #{tpu_custom_call.1} parent=1 // pred_region
      _
    $region9: #{tpu_custom_call.1} parent=1 // pred_fallthru
      _
    // Predicated region
    $region10: #{tpu_custom_call.1} parent=1 // pred_check
      _
    $region11: #{tpu_custom_call.1} parent=1 // pred_check_branch
      %27 = sbr.rel (0) target = $region13
    $region12: #{tpu_custom_call.1} parent=1 // pred_region
      _
    $region13: #{tpu_custom_call.1} parent=1 // pred_fallthru
      _
    // Predicated region
    $region14: #{tpu_custom_call.1} parent=1 // pred_check
      _
    $region15: #{tpu_custom_call.1} parent=1 // pred_check_branch
      %29 = sbr.rel (0) target = $region17
    $region16: #{tpu_custom_call.1} parent=1 // pred_region
      _
    $region17: #{tpu_custom_call.1} parent=1 // pred_fallthru
      _
    // Predicated region
    $region18: #{tpu_custom_call.1} parent=1 // pred_check
      _
    $region19: #{tpu_custom_call.1} parent=1 // pred_check_branch
      %31 = sbr.rel (0) target = $region21
    $region20: #{tpu_custom_call.1} parent=1 // pred_region
      _
    $region21: #{tpu_custom_call.1} parent=1 // pred_fallthru
      _
    // Predicated region
    $region22: #{tpu_custom_call.1} parent=1 // pred_check
      _
    $region23: #{tpu_custom_call.1} parent=1 // pred_check_branch
      %33 = sbr.rel (0) target = $region25
    $region24: #{tpu_custom_call.1} parent=1 // pred_region
      %34 = dma.done [#allocation3], 2304
    $region25: #{tpu_custom_call.1} parent=1 // pred_fallthru
      _
    %v36 = vld [vmem:[#allocation2] sm:$0xff]
    %v37 = vld [vmem:[#allocation2 + $0x8] sm:$0xff]
    %v38 = vld [vmem:[#allocation2 + $0x10] sm:$0xff]
    %v39 = vld [vmem:[#allocation2 + $0x18] sm:$0xff]
    %v40 = vld [vmem:[#allocation2 + $0x20] sm:$0xff]
    %v41 = vld [vmem:[#allocation2 + $0x28] sm:$0xff]
    %v42 = vld [vmem:[#allocation2 + $0x30] sm:$0xff]
    %v43 = vld [vmem:[#allocation2 + $0x38] sm:$0xff]
    %v44 = vld [vmem:[#allocation2 + $0x40] sm:$0xff]
    %v45 = vld [vmem:[#allocation2 + $0x48] sm:$0xff]
    %v46 = vld [vmem:[#allocation2 + $0x50] sm:$0xff]
    %v47 = vld [vmem:[#allocation2 + $0x58] sm:$0xff]
    %v48 = vld [vmem:[#allocation2 + $0x60] sm:$0xff]
    %v49 = vld [vmem:[#allocation2 + $0x68] sm:$0xff]
    %v50 = vld [vmem:[#allocation2 + $0x70] sm:$0xff]
    %v51 = vld [vmem:[#allocation2 + $0x78] sm:$0xff]
    %v52 = vld [vmem:[#allocation2 + $0x80] sm:$0xff]
    %v53 = vld [vmem:[#allocation2 + $0x88] sm:$0xff]
    %v54 = vpack.c.bf16 %v37, %v36
    %v55 = vpack.c.bf16 %v38, %v38
    %v56 = vpack.c.bf16 %v40, %v39
    %v57 = vpack.c.bf16 %v41, %v41
    %v58 = vpack.c.bf16 %v43, %v42
    %v59 = vpack.c.bf16 %v44, %v44
    %v60 = vpack.c.bf16 %v46, %v45
    %v61 = vpack.c.bf16 %v47, %v47
    %v62 = vpack.c.bf16 %v49, %v48
    %v63 = vpack.c.bf16 %v50, %v50
    %v64 = vpack.c.bf16 %v52, %v51
    %v65 = vpack.c.bf16 %v53, %v53
    %v66 = vld [vmem:[%s2] sm:$0xff]
    %v67 = vld [vmem:[%s2 + $0x8] sm:$0xff]
    %v68 = vld [vmem:[%s2 + $0x10] sm:$0xf]
    %v69 = vpack.c.bf16 %v67, %v66
    %v70 = vpack.c.bf16 %v68, %v68
    %v71 = vld [vmem:[%s1] sm:$0xff]
    %v72 = vld [vmem:[%s1 + $0x8] sm:$0xff]
    %v73 = vpack.c.bf16 %v72, %v71
    %vm74 = vcmask 195584
    %v76 = vsel %vm74, %v73, 0
    %vm78 = vcmask 1043456
    %v80 = vsel %vm78, %v55, 0
    %82 = vmatprep.subr.bf16.mxu0 0
    %83 = vmatpush1.bf16.msra.mxu0 %v54
    %84 = vmatprep.subr.bf16.mxu0 0
    %85 = vmatpush1.bf16.msra.mxu0 %v80
    %86 = vmatprep.subr.bf16.mxu0 0
    %87 = vmatpush1.bf16.msra.mxu0 0
    %88 = vmatprep.subr.bf16.mxu0 0
    %89 = vmatpush1.bf16.msra.mxu0 0
    %90 = vmatprep.subr.bf16.mxu0 0
    %91 = vmatpush1.bf16.msra.mxu0 0
    %92 = vmatprep.subr.bf16.mxu0 0
    %93 = vmatpush1.bf16.msra.mxu0 0
    %94 = vmatprep.subr.bf16.mxu0 0
    %95 = vmatpush1.bf16.msra.mxu0 0
    %96 = vmatprep.subr.bf16.mxu0 0
    %97 = vmatpush1.bf16.msra.mxu0 0
    %98 = vmatprep.subr.bf16.mxu0 0
    %99 = vmatpush1.bf16.msra.mxu0 0
    %100 = vmatprep.subr.bf16.mxu0 0
    %101 = vmatpush1.bf16.msra.mxu0 0
    %102 = vmatprep.subr.bf16.mxu0 0
    %103 = vmatpush1.bf16.msra.mxu0 0
    %104 = vmatprep.subr.bf16.mxu0 0
    %105 = vmatpush1.bf16.msra.mxu0 0
    %106 = vmatprep.subr.bf16.mxu0 0
    %107 = vmatpush1.bf16.msra.mxu0 0
    %108 = vmatprep.subr.bf16.mxu0 0
    %109 = vmatpush1.bf16.msra.mxu0 0
    %110 = vmatprep.subr.bf16.mxu0 0
    %111 = vmatpush1.bf16.msra.mxu0 0
    %112 = vmatprep.subr.bf16.mxu0 0
    %113 = vmatpush1.bf16.msra.mxu0 0
    %114 = vmatprep.mubr.bf16.mxu0 0
    %115 = vmatmul.mubr.bf16.gmra.mrb[0].mxu0 %v76
    %v116 = vpop.f32.mrb[0].mxu0
    %v117 = vadd.f32 0.0, %v116
    %v118 = vpop.f32.mrb[0].mxu0
    %v119 = vpop.f32.mrb[0].mxu0
    %v120 = vadd.f32 0.0, %v119
    %v121 = vpop.f32.mrb[0].mxu0
    %122 = vdwg.mxu0
    %v124 = vsel %vm78, %v57, 0
    %126 = vmatprep.subr.bf16.mxu0 0
    %127 = vmatpush1.bf16.msra.mxu0 %v56
    %128 = vmatprep.subr.bf16.mxu0 0
    %129 = vmatpush1.bf16.msra.mxu0 %v124
    %130 = vmatprep.subr.bf16.mxu0 0
    %131 = vmatpush1.bf16.msra.mxu0 0
    %132 = vmatprep.subr.bf16.mxu0 0
    %133 = vmatpush1.bf16.msra.mxu0 0
    %134 = vmatprep.subr.bf16.mxu0 0
    %135 = vmatpush1.bf16.msra.mxu0 0
    %136 = vmatprep.subr.bf16.mxu0 0
    %137 = vmatpush1.bf16.msra.mxu0 0
    %138 = vmatprep.subr.bf16.mxu0 0
    %139 = vmatpush1.bf16.msra.mxu0 0
    %140 = vmatprep.subr.bf16.mxu0 0
    %141 = vmatpush1.bf16.msra.mxu0 0
    %142 = vmatprep.subr.bf16.mxu0 0
    %143 = vmatpush1.bf16.msra.mxu0 0
    %144 = vmatprep.subr.bf16.mxu0 0
    %145 = vmatpush1.bf16.msra.mxu0 0
    %146 = vmatprep.subr.bf16.mxu0 0
    %147 = vmatpush1.bf16.msra.mxu0 0
    %148 = vmatprep.subr.bf16.mxu0 0
    %149 = vmatpush1.bf16.msra.mxu0 0
    %150 = vmatprep.subr.bf16.mxu0 0
    %151 = vmatpush1.bf16.msra.mxu0 0
    %152 = vmatprep.subr.bf16.mxu0 0
    %153 = vmatpush1.bf16.msra.mxu0 0
    %154 = vmatprep.subr.bf16.mxu0 0
    %155 = vmatpush1.bf16.msra.mxu0 0
    %156 = vmatprep.subr.bf16.mxu0 0
    %157 = vmatpush1.bf16.msra.mxu0 0
    %158 = vmatprep.mubr.bf16.mxu0 0
    %159 = vmatmul.mubr.bf16.gmra.mrb[0].mxu0 %v76
    %v160 = vpop.f32.mrb[0].mxu0
    %v161 = vadd.f32 0.0, %v160
    %v162 = vpop.f32.mrb[0].mxu0
    %v163 = vpop.f32.mrb[0].mxu0
    %v164 = vadd.f32 0.0, %v163
    %v165 = vpop.f32.mrb[0].mxu0
    %166 = vdwg.mxu0
    %v168 = vsel %vm78, %v59, 0
    %170 = vmatprep.subr.bf16.mxu0 0
    %171 = vmatpush1.bf16.msra.mxu0 %v58
    %172 = vmatprep.subr.bf16.mxu0 0
    %173 = vmatpush1.bf16.msra.mxu0 %v168
    %174 = vmatprep.subr.bf16.mxu0 0
    %175 = vmatpush1.bf16.msra.mxu0 0
    %176 = vmatprep.subr.bf16.mxu0 0
    %177 = vmatpush1.bf16.msra.mxu0 0
    %178 = vmatprep.subr.bf16.mxu0 0
    %179 = vmatpush1.bf16.msra.mxu0 0
    %180 = vmatprep.subr.bf16.mxu0 0
    %181 = vmatpush1.bf16.msra.mxu0 0
    %182 = vmatprep.subr.bf16.mxu0 0
    %183 = vmatpush1.bf16.msra.mxu0 0
    %184 = vmatprep.subr.bf16.mxu0 0
    %185 = vmatpush1.bf16.msra.mxu0 0
    %186 = vmatprep.subr.bf16.mxu0 0
    %187 = vmatpush1.bf16.msra.mxu0 0
    %188 = vmatprep.subr.bf16.mxu0 0
    %189 = vmatpush1.bf16.msra.mxu0 0
    %190 = vmatprep.subr.bf16.mxu0 0
    %191 = vmatpush1.bf16.msra.mxu0 0
    %192 = vmatprep.subr.bf16.mxu0 0
    %193 = vmatpush1.bf16.msra.mxu0 0
    %194 = vmatprep.subr.bf16.mxu0 0
    %195 = vmatpush1.bf16.msra.mxu0 0
    %196 = vmatprep.subr.bf16.mxu0 0
    %197 = vmatpush1.bf16.msra.mxu0 0
    %198 = vmatprep.subr.bf16.mxu0 0
    %199 = vmatpush1.bf16.msra.mxu0 0
    %200 = vmatprep.subr.bf16.mxu0 0
    %201 = vmatpush1.bf16.msra.mxu0 0
    %202 = vmatprep.mubr.bf16.mxu0 0
    %203 = vmatmul.mubr.bf16.gmra.mrb[0].mxu0 %v76
    %v204 = vpop.f32.mrb[0].mxu0
    %v205 = vadd.f32 0.0, %v204
    %v206 = vpop.f32.mrb[0].mxu0
    %v207 = vpop.f32.mrb[0].mxu0
    %v208 = vadd.f32 0.0, %v207
    %v209 = vpop.f32.mrb[0].mxu0
    %210 = vdwg.mxu0
    %v212 = vsel %vm78, %v61, 0
    %214 = vmatprep.subr.bf16.mxu0 0
    %215 = vmatpush1.bf16.msra.mxu0 %v60
    %216 = vmatprep.subr.bf16.mxu0 0
    %217 = vmatpush1.bf16.msra.mxu0 %v212
    %218 = vmatprep.subr.bf16.mxu0 0
    %219 = vmatpush1.bf16.msra.mxu0 0
    %220 = vmatprep.subr.bf16.mxu0 0
    %221 = vmatpush1.bf16.msra.mxu0 0
    %222 = vmatprep.subr.bf16.mxu0 0
    %223 = vmatpush1.bf16.msra.mxu0 0
    %224 = vmatprep.subr.bf16.mxu0 0
    %225 = vmatpush1.bf16.msra.mxu0 0
    %226 = vmatprep.subr.bf16.mxu0 0
    %227 = vmatpush1.bf16.msra.mxu0 0
    %228 = vmatprep.subr.bf16.mxu0 0
    %229 = vmatpush1.bf16.msra.mxu0 0
    %230 = vmatprep.subr.bf16.mxu0 0
    %231 = vmatpush1.bf16.msra.mxu0 0
    %232 = vmatprep.subr.bf16.mxu0 0
    %233 = vmatpush1.bf16.msra.mxu0 0
    %234 = vmatprep.subr.bf16.mxu0 0
    %235 = vmatpush1.bf16.msra.mxu0 0
    %236 = vmatprep.subr.bf16.mxu0 0
    %237 = vmatpush1.bf16.msra.mxu0 0
    %238 = vmatprep.subr.bf16.mxu0 0
    %239 = vmatpush1.bf16.msra.mxu0 0
    %240 = vmatprep.subr.bf16.mxu0 0
    %241 = vmatpush1.bf16.msra.mxu0 0
    %242 = vmatprep.subr.bf16.mxu0 0
    %243 = vmatpush1.bf16.msra.mxu0 0
    %244 = vmatprep.subr.bf16.mxu0 0
    %245 = vmatpush1.bf16.msra.mxu0 0
    %246 = vmatprep.mubr.bf16.mxu0 0
    %247 = vmatmul.mubr.bf16.gmra.mrb[0].mxu0 %v76
    %v248 = vpop.f32.mrb[0].mxu0
    %v249 = vadd.f32 0.0, %v248
    %v250 = vpop.f32.mrb[0].mxu0
    %v251 = vpop.f32.mrb[0].mxu0
    %v252 = vadd.f32 0.0, %v251
    %v253 = vpop.f32.mrb[0].mxu0
    %254 = vdwg.mxu0
    %v256 = vsel %vm78, %v63, 0
    %258 = vmatprep.subr.bf16.mxu0 0
    %259 = vmatpush1.bf16.msra.mxu0 %v62
    %260 = vmatprep.subr.bf16.mxu0 0
    %261 = vmatpush1.bf16.msra.mxu0 %v256
    %262 = vmatprep.subr.bf16.mxu0 0
    %263 = vmatpush1.bf16.msra.mxu0 0
    %264 = vmatprep.subr.bf16.mxu0 0
    %265 = vmatpush1.bf16.msra.mxu0 0
    %266 = vmatprep.subr.bf16.mxu0 0
    %267 = vmatpush1.bf16.msra.mxu0 0
    %268 = vmatprep.subr.bf16.mxu0 0
    %269 = vmatpush1.bf16.msra.mxu0 0
    %270 = vmatprep.subr.bf16.mxu0 0
    %271 = vmatpush1.bf16.msra.mxu0 0
    %272 = vmatprep.subr.bf16.mxu0 0
    %273 = vmatpush1.bf16.msra.mxu0 0
    %274 = vmatprep.subr.bf16.mxu0 0
    %275 = vmatpush1.bf16.msra.mxu0 0
    %276 = vmatprep.subr.bf16.mxu0 0
    %277 = vmatpush1.bf16.msra.mxu0 0
    %278 = vmatprep.subr.bf16.mxu0 0
    %279 = vmatpush1.bf16.msra.mxu0 0
    %280 = vmatprep.subr.bf16.mxu0 0
    %281 = vmatpush1.bf16.msra.mxu0 0
    %282 = vmatprep.subr.bf16.mxu0 0
    %283 = vmatpush1.bf16.msra.mxu0 0
    %284 = vmatprep.subr.bf16.mxu0 0
    %285 = vmatpush1.bf16.msra.mxu0 0
    %286 = vmatprep.subr.bf16.mxu0 0
    %287 = vmatpush1.bf16.msra.mxu0 0
    %288 = vmatprep.subr.bf16.mxu0 0
    %289 = vmatpush1.bf16.msra.mxu0 0
    %290 = vmatprep.mubr.bf16.mxu0 0
    %291 = vmatmul.mubr.bf16.gmra.mrb[0].mxu0 %v76
    %v292 = vpop.f32.mrb[0].mxu0
    %v293 = vadd.f32 0.0, %v292
    %v294 = vpop.f32.mrb[0].mxu0
    %v295 = vpop.f32.mrb[0].mxu0
    %v296 = vadd.f32 0.0, %v295
    %v297 = vpop.f32.mrb[0].mxu0
    %298 = vdwg.mxu0
    %v300 = vsel %vm78, %v65, 0
    %302 = vmatprep.subr.bf16.mxu0 0
    %303 = vmatpush1.bf16.msra.mxu0 %v64
    %304 = vmatprep.subr.bf16.mxu0 0
    %305 = vmatpush1.bf16.msra.mxu0 %v300
    %306 = vmatprep.subr.bf16.mxu0 0
    %307 = vmatpush1.bf16.msra.mxu0 0
    %308 = vmatprep.subr.bf16.mxu0 0
    %309 = vmatpush1.bf16.msra.mxu0 0
    %310 = vmatprep.subr.bf16.mxu0 0
    %311 = vmatpush1.bf16.msra.mxu0 0
    %312 = vmatprep.subr.bf16.mxu0 0
    %313 = vmatpush1.bf16.msra.mxu0 0
    %314 = vmatprep.subr.bf16.mxu0 0
    %315 = vmatpush1.bf16.msra.mxu0 0
    %316 = vmatprep.subr.bf16.mxu0 0
    %317 = vmatpush1.bf16.msra.mxu0 0
    %318 = vmatprep.subr.bf16.mxu0 0
    %319 = vmatpush1.bf16.msra.mxu0 0
    %320 = vmatprep.subr.bf16.mxu0 0
    %321 = vmatpush1.bf16.msra.mxu0 0
    %322 = vmatprep.subr.bf16.mxu0 0
    %323 = vmatpush1.bf16.msra.mxu0 0
    %324 = vmatprep.subr.bf16.mxu0 0
    %325 = vmatpush1.bf16.msra.mxu0 0
    %326 = vmatprep.subr.bf16.mxu0 0
    %327 = vmatpush1.bf16.msra.mxu0 0
    %328 = vmatprep.subr.bf16.mxu0 0
    %329 = vmatpush1.bf16.msra.mxu0 0
    %330 = vmatprep.subr.bf16.mxu0 0
    %331 = vmatpush1.bf16.msra.mxu0 0
    %332 = vmatprep.subr.bf16.mxu0 0
    %333 = vmatpush1.bf16.msra.mxu0 0
    %334 = vmatprep.mubr.bf16.mxu0 0
    %335 = vmatmul.mubr.bf16.gmra.mrb[0].mxu0 %v76
    %v336 = vpop.f32.mrb[0].mxu0
    %v337 = vadd.f32 0.0, %v336
    %v338 = vpop.f32.mrb[0].mxu0
    %v339 = vpop.f32.mrb[0].mxu0
    %v340 = vadd.f32 0.0, %v339
    %v341 = vpop.f32.mrb[0].mxu0
    %342 = vdwg.mxu0
    %v343 = vpack.c.bf16 %v120, %v117
    %v344 = vpack.c.bf16 %v164, %v161
    %v345 = vpack.c.bf16 %v208, %v205
    %v346 = vpack.c.bf16 %v252, %v249
    %v347 = vpack.c.bf16 %v296, %v293
    %v348 = vpack.c.bf16 %v340, %v337
    %vm349 = vcmask 162816
    %v351 = vsel %vm349, %v343, 0
    %v354 = vsel %vm349, %v344, 0
    %v357 = vsel %vm349, %v345, 0
    %v360 = vsel %vm349, %v346, 0
    %v363 = vsel %vm349, %v347, 0
    %v366 = vsel %vm349, %v348, 0
    %vm368 = vcmask 1041408
    %v370 = vsel %vm368, %v70, 0
    %372 = vmatprep.subr.bf16.mxu0 0
    %373 = vmatpush1.bf16.msra.mxu0 %v69
    %374 = vmatprep.subr.bf16.mxu0 0
    %375 = vmatpush1.bf16.msra.mxu0 %v370
    %376 = vmatprep.subr.bf16.mxu0 0
    %377 = vmatpush1.bf16.msra.mxu0 0
    %378 = vmatprep.subr.bf16.mxu0 0
    %379 = vmatpush1.bf16.msra.mxu0 0
    %380 = vmatprep.subr.bf16.mxu0 0
    %381 = vmatpush1.bf16.msra.mxu0 0
    %382 = vmatprep.subr.bf16.mxu0 0
    %383 = vmatpush1.bf16.msra.mxu0 0
    %384 = vmatprep.subr.bf16.mxu0 0
    %385 = vmatpush1.bf16.msra.mxu0 0
    %386 = vmatprep.subr.bf16.mxu0 0
    %387 = vmatpush1.bf16.msra.mxu0 0
    %388 = vmatprep.subr.bf16.mxu0 0
    %389 = vmatpush1.bf16.msra.mxu0 0
    %390 = vmatprep.subr.bf16.mxu0 0
    %391 = vmatpush1.bf16.msra.mxu0 0
    %392 = vmatprep.subr.bf16.mxu0 0
    %393 = vmatpush1.bf16.msra.mxu0 0
    %394 = vmatprep.subr.bf16.mxu0 0
    %395 = vmatpush1.bf16.msra.mxu0 0
    %396 = vmatprep.subr.bf16.mxu0 0
    %397 = vmatpush1.bf16.msra.mxu0 0
    %398 = vmatprep.subr.bf16.mxu0 0
    %399 = vmatpush1.bf16.msra.mxu0 0
    %400 = vmatprep.subr.bf16.mxu0 0
    %401 = vmatpush1.bf16.msra.mxu0 0
    %402 = vmatprep.subr.bf16.mxu0 0
    %403 = vmatpush1.bf16.msra.mxu0 0
    %404 = vmatprep.mubr.bf16.mxu0 0
    %405 = vmatmul.mubr.bf16.gmra.mrb[0].mxu0 %v351
    %v406 = vpop.f32.mrb[0].mxu0
    %v407 = vadd.f32 0.0, %v406
    %v408 = vpop.f32.mrb[0].mxu0
    %v409 = vpop.f32.mrb[0].mxu0
    %v410 = vadd.f32 0.0, %v409
    %v411 = vpop.f32.mrb[0].mxu0
    %412 = vmatprep.mubr.bf16.mxu0 0
    %413 = vmatmul.mubr.bf16.gmra.mrb[0].mxu0 %v354
    %v414 = vpop.f32.mrb[0].mxu0
    %v415 = vadd.f32 0.0, %v414
    %v416 = vpop.f32.mrb[0].mxu0
    %v417 = vpop.f32.mrb[0].mxu0
    %v418 = vadd.f32 0.0, %v417
    %v419 = vpop.f32.mrb[0].mxu0
    %420 = vmatprep.mubr.bf16.mxu0 0
    %421 = vmatmul.mubr.bf16.gmra.mrb[0].mxu0 %v357
    %v422 = vpop.f32.mrb[0].mxu0
    %v423 = vadd.f32 0.0, %v422
    %v424 = vpop.f32.mrb[0].mxu0
    %v425 = vpop.f32.mrb[0].mxu0
    %v426 = vadd.f32 0.0, %v425
    %v427 = vpop.f32.mrb[0].mxu0
    %428 = vmatprep.mubr.bf16.mxu0 0
    %429 = vmatmul.mubr.bf16.gmra.mrb[0].mxu0 %v360
    %v430 = vpop.f32.mrb[0].mxu0
    %v431 = vadd.f32 0.0, %v430
    %v432 = vpop.f32.mrb[0].mxu0
    %v433 = vpop.f32.mrb[0].mxu0
    %v434 = vadd.f32 0.0, %v433
    %v435 = vpop.f32.mrb[0].mxu0
    %436 = vmatprep.mubr.bf16.mxu0 0
    %437 = vmatmul.mubr.bf16.gmra.mrb[0].mxu0 %v363
    %v438 = vpop.f32.mrb[0].mxu0
    %v439 = vadd.f32 0.0, %v438
    %v440 = vpop.f32.mrb[0].mxu0
    %v441 = vpop.f32.mrb[0].mxu0
    %v442 = vadd.f32 0.0, %v441
    %v443 = vpop.f32.mrb[0].mxu0
    %444 = vmatprep.mubr.bf16.mxu0 0
    %445 = vmatmul.mubr.bf16.gmra.mrb[0].mxu0 %v366
    %v446 = vpop.f32.mrb[0].mxu0
    %v447 = vadd.f32 0.0, %v446
    %v448 = vpop.f32.mrb[0].mxu0
    %v449 = vpop.f32.mrb[0].mxu0
    %v450 = vadd.f32 0.0, %v449
    %v451 = vpop.f32.mrb[0].mxu0
    %452 = vdwg.mxu0
    %v453 = vld [vmem:[%s3] sm:$0x1]
    %v454 = vld [vmem:[%s3 + $0x1] sm:$0x1]
    %v455 = vld [vmem:[%s3 + $0x2] sm:$0x1]
    %v456 = vld [vmem:[%s3 + $0x3] sm:$0x1]
    %v457 = vld [vmem:[%s3 + $0x4] sm:$0x1]
    %v458 = vld [vmem:[%s3 + $0x5] sm:$0x1]
    %v459 = vld [vmem:[%s4] sm:$0x1]
    %v460 = vld [vmem:[%s4 + $0x1] sm:$0x1]
    %v461 = vld [vmem:[%s4 + $0x2] sm:$0x1]
    %v462 = vld [vmem:[%s4 + $0x3] sm:$0x1]
    %v463 = vld [vmem:[%s4 + $0x4] sm:$0x1]
    %v464 = vld [vmem:[%s4 + $0x5] sm:$0x1]
    %v471 = vlaneseq
    %v472 = vshrl.u32 %v471, 7
    %v473 = vsub.s32 0, %v472
    %v474 = vrot.slane %v453, %v473
    %v475 = vlaneseq
    %v476 = vshrl.u32 %v475, 7
    %v477 = vsub.s32 0, %v476
    %v478 = vrot.slane %v454, %v477
    %v479 = vlaneseq
    %v480 = vshrl.u32 %v479, 7
    %v481 = vsub.s32 0, %v480
    %v482 = vrot.slane %v455, %v481
    %v483 = vlaneseq
    %v484 = vshrl.u32 %v483, 7
    %v485 = vsub.s32 0, %v484
    %v486 = vrot.slane %v456, %v485
    %v487 = vlaneseq
    %v488 = vshrl.u32 %v487, 7
    %v489 = vsub.s32 0, %v488
    %v490 = vrot.slane %v457, %v489
    %v491 = vlaneseq
    %v492 = vshrl.u32 %v491, 7
    %v493 = vsub.s32 0, %v492
    %v494 = vrot.slane %v458, %v493
    %495 = vset.pattern.permute.xlu0 0
    %496 = vperm.xlu0 %495, %v474
    %v497 = vpop.permute.xlu0 %496
    %499 = vset.pattern.permute.xlu0 0
    %500 = vperm.xlu0 %499, %v478
    %v501 = vpop.permute.xlu0 %500
    %503 = vset.pattern.permute.xlu0 0
    %504 = vperm.xlu0 %503, %v482
    %v505 = vpop.permute.xlu0 %504
    %507 = vset.pattern.permute.xlu0 0
    %508 = vperm.xlu0 %507, %v486
    %v509 = vpop.permute.xlu0 %508
    %511 = vset.pattern.permute.xlu0 0
    %512 = vperm.xlu0 %511, %v490
    %v513 = vpop.permute.xlu0 %512
    %515 = vset.pattern.permute.xlu0 0
    %516 = vperm.xlu0 %515, %v494
    %v517 = vpop.permute.xlu0 %516
    %v519 = vmul.f32 %v407, %v497
    %v520 = vmul.f32 %v410, %v497
    %v521 = vmul.f32 %v415, %v501
    %v522 = vmul.f32 %v418, %v501
    %v523 = vmul.f32 %v423, %v505
    %v524 = vmul.f32 %v426, %v505
    %v525 = vmul.f32 %v431, %v509
    %v526 = vmul.f32 %v434, %v509
    %v527 = vmul.f32 %v439, %v513
    %v528 = vmul.f32 %v442, %v513
    %v529 = vmul.f32 %v447, %v517
    %v530 = vmul.f32 %v450, %v517
    %v537 = vlaneseq
    %v538 = vshrl.u32 %v537, 7
    %v539 = vsub.s32 0, %v538
    %v540 = vrot.slane %v459, %v539
    %v541 = vlaneseq
    %v542 = vshrl.u32 %v541, 7
    %v543 = vsub.s32 0, %v542
    %v544 = vrot.slane %v460, %v543
    %v545 = vlaneseq
    %v546 = vshrl.u32 %v545, 7
    %v547 = vsub.s32 0, %v546
    %v548 = vrot.slane %v461, %v547
    %v549 = vlaneseq
    %v550 = vshrl.u32 %v549, 7
    %v551 = vsub.s32 0, %v550
    %v552 = vrot.slane %v462, %v551
    %v553 = vlaneseq
    %v554 = vshrl.u32 %v553, 7
    %v555 = vsub.s32 0, %v554
    %v556 = vrot.slane %v463, %v555
    %v557 = vlaneseq
    %v558 = vshrl.u32 %v557, 7
    %v559 = vsub.s32 0, %v558
    %v560 = vrot.slane %v464, %v559
    %561 = vset.pattern.permute.xlu0 0
    %562 = vperm.xlu0 %561, %v540
    %v563 = vpop.permute.xlu0 %562
    %565 = vset.pattern.permute.xlu0 0
    %566 = vperm.xlu0 %565, %v544
    %v567 = vpop.permute.xlu0 %566
    %569 = vset.pattern.permute.xlu0 0
    %570 = vperm.xlu0 %569, %v548
    %v571 = vpop.permute.xlu0 %570
    %573 = vset.pattern.permute.xlu0 0
    %574 = vperm.xlu0 %573, %v552
    %v575 = vpop.permute.xlu0 %574
    %577 = vset.pattern.permute.xlu0 0
    %578 = vperm.xlu0 %577, %v556
    %v579 = vpop.permute.xlu0 %578
    %581 = vset.pattern.permute.xlu0 0
    %582 = vperm.xlu0 %581, %v560
    %v583 = vpop.permute.xlu0 %582
    %v585 = vadd.f32 %v519, %v563
    %v586 = vadd.f32 %v520, %v563
    %v587 = vadd.f32 %v521, %v567
    %v588 = vadd.f32 %v522, %v567
    %v589 = vadd.f32 %v523, %v571
    %v590 = vadd.f32 %v524, %v571
    %v591 = vadd.f32 %v525, %v575
    %v592 = vadd.f32 %v526, %v575
    %v593 = vadd.f32 %v527, %v579
    %v594 = vadd.f32 %v528, %v579
    %v595 = vadd.f32 %v529, %v583
    %v596 = vadd.f32 %v530, %v583
    %vm597 = vcmask 130048
    %598 = vst.msk [vmem:[#allocation5] sm:$0xff] %vm597, %v585
    %599 = vst.msk [vmem:[#allocation5 + $0x8] sm:$0xff] %vm597, %v586
    %600 = vst.msk [vmem:[#allocation5 + $0x10] sm:$0xff] %vm597, %v587
    %601 = vst.msk [vmem:[#allocation5 + $0x18] sm:$0xff] %vm597, %v588
    %602 = vst.msk [vmem:[#allocation5 + $0x20] sm:$0xff] %vm597, %v589
    %603 = vst.msk [vmem:[#allocation5 + $0x28] sm:$0xff] %vm597, %v590
    %604 = vst.msk [vmem:[#allocation5 + $0x30] sm:$0xff] %vm597, %v591
    %605 = vst.msk [vmem:[#allocation5 + $0x38] sm:$0xff] %vm597, %v592
    %606 = vst.msk [vmem:[#allocation5 + $0x40] sm:$0xff] %vm597, %v593
    %607 = vst.msk [vmem:[#allocation5 + $0x48] sm:$0xff] %vm597, %v594
    %608 = vst.msk [vmem:[#allocation5 + $0x50] sm:$0xff] %vm597, %v595
    %609 = vst.msk [vmem:[#allocation5 + $0x58] sm:$0xff] %vm597, %v596
    // Predicated region
    $region26: #{tpu_custom_call.1} parent=1 // pred_check
      _
    $region27: #{tpu_custom_call.1} parent=1 // pred_check_branch
      %611 = sbr.rel (0) target = $region29
    $region28: #{tpu_custom_call.1} parent=1 // pred_region
      %s613 = ssub.s32 1536, 1536
      %614 = vsyncadd [#allocation4], %s613
      %s615 = sshll.u32 [#allocation5], 4
      %s616 = int_to_ptr.vmem [resolvable:$true] %s615
      %621 = dma.vmem_to_hbm [thread:$0]  %s616, 1536, %s5, [#allocation4], 128, 128, 8
    $region29: #{tpu_custom_call.1} parent=1 // pred_fallthru
      _
    // Predicated region
    $region30: #{tpu_custom_call.1} parent=1 // pred_check
      _
    $region31: #{tpu_custom_call.1} parent=1 // pred_check_branch
      %623 = sbr.rel (0) target = $region33
    $region32: #{tpu_custom_call.1} parent=1 // pred_region
      %624 = dma.done [#allocation4], 1536
    $region33: #{tpu_custom_call.1} parent=1 // pred_fallthru
      _
    %625 = vsyncpa [#allocation3], 1
    %626 = vsyncpa [#allocation4], 1

</llo_original>
